<compile_context>
chip_gen: v6e
topology: v6e:2x2x1
jax: 0.10.0
libtpu: 0.0.40
codegen_flags: <defaults>
</compile_context>

<pallas_src>
import functools

import jax
import jax.numpy as jnp
from jax.experimental import pallas as pl
from jax.experimental.pallas import tpu as pltpu

LANE = 128
BN_EPS = 1e-5


# ----------------------------------------------------------------------------
# Pallas kernel: one graph per grid step, the whole GIN stack fused, all layer
# weights VMEM-resident across the graph grid (constant index_map).
# ----------------------------------------------------------------------------
def gin_fused_kernel(x_ref, a_ref, w1_ref, w2_ref, vec_ref, o_ref, *, num_layers, k_pad):
    a = a_ref[...]                                  # [N, N] bf16 mean-aggregation + identity
    h = x_ref[...].astype(jnp.float32)              # [N, F_PAD] f32 running activations
    for layer in range(num_layers):                 # static unroll: LLO sees all matmuls
        if layer > 0:
            h = jnp.maximum(h, 0.0)                 # inter-layer F.relu (fused)

        # (1+eps)*x + mean over incoming edges, eps=0 — self-loop folded into a_hat.
        h = jnp.dot(a, h.astype(jnp.bfloat16), preferred_element_type=jnp.float32)

        vec = vec_ref[layer]                        # [4, F_PAD] f32 = (b1, gamma, beta, b2)

        # Linear(d_in, hidden): slice to the true (unpadded) contraction width.
        z = jnp.dot(h[:, :k_pad].astype(jnp.bfloat16), w1_ref[layer],
                    preferred_element_type=jnp.float32) + vec[0:1, :]

        # BatchNorm1d over the node (batch) axis: two-pass biased stats,
        # gamma/beta pre-folded into one per-feature scale + shift (single FMA).
        mu = jnp.mean(z, axis=0, keepdims=True)
        dz = z - mu
        var = jnp.mean(dz * dz, axis=0, keepdims=True)
        scale = vec[1:2, :] * jax.lax.rsqrt(var + BN_EPS)
        shift = vec[2:3, :] - mu * scale
        zn = z * scale + shift

        # ReLU + Linear(hidden, hidden)
        h = jnp.dot(jnp.maximum(zn, 0.0)[:, :k_pad].astype(jnp.bfloat16), w2_ref[layer],
                    preferred_element_type=jnp.float32) + vec[3:4, :]

    o_ref[...] = h                                  # lane-dense [N, F_PAD] f32 output slab


def gin_forward(x, a_hat, w1_stack, w2_stack, vec_stack, hidden_dim):
    """x: [G, N, in_dim] f32, a_hat: [G, N, N] f32 -> [G, N, hidden_dim] f32."""
    num_graphs, num_nodes, in_dim = x.shape
    num_layers, k_pad, f_pad = w1_stack.shape

    # lane-dense, bf16 node features; padded lanes are exactly zero.
    x_pad = jnp.pad(x.astype(jnp.float32),
                    ((0, 0), (0, 0), (0, f_pad - in_dim))).astype(jnp.bfloat16)
    a_bf = a_hat.astype(jnp.bfloat16)

    kernel = functools.partial(gin_fused_kernel, num_layers=num_layers, k_pad=k_pad)
    out = pl.pallas_call(
        kernel,
        out_shape=jax.ShapeDtypeStruct((num_graphs, num_nodes, f_pad), jnp.float32),
        grid=(num_graphs,),
        in_specs=[
            # per-graph blocks (leading graph dim squeezed out of the kernel view)
            pl.BlockSpec((None, num_nodes, f_pad), lambda g: (g, 0, 0)),
            pl.BlockSpec((None, num_nodes, num_nodes), lambda g: (g, 0, 0)),
            # weights: constant index_map -> DMA'd once, VMEM-resident for all graphs
            pl.BlockSpec((num_layers, k_pad, f_pad), lambda g: (0, 0, 0)),
            pl.BlockSpec((num_layers, k_pad, f_pad), lambda g: (0, 0, 0)),
            pl.BlockSpec((num_layers, 4, f_pad), lambda g: (0, 0, 0)),
        ],
        out_specs=pl.BlockSpec((None, num_nodes, f_pad), lambda g: (g, 0, 0)),
        compiler_params=pltpu.CompilerParams(dimension_semantics=("parallel",)),
    )(x_pad, a_bf, w1_stack, w2_stack, vec_stack)
    return out[:, :, :hidden_dim]


# ----------------------------------------------------------------------------
# Glue (plain JAX): dense mean-adjacency with folded self-loop, params, packing.
# ----------------------------------------------------------------------------
def build_mean_adj_hat(edge_index, num_nodes):
    # flow='source_to_target': messages go edge_index[0] (src) -> edge_index[1] (dst).
    src = edge_index[0].astype(jnp.int32)
    dst = edge_index[1].astype(jnp.int32)
    adj = jnp.zeros((num_nodes, num_nodes), jnp.float32).at[dst, src].add(1.0)
    deg = jnp.clip(jnp.sum(adj, axis=1, keepdims=True), 1.0, None)
    # eps = 0 self term folded in: A_hat = I + A/deg_in
    return adj / deg + jnp.eye(num_nodes, dtype=jnp.float32)


def init_linear(key, fan_in, fan_out):
    k_w, k_b = jax.random.split(key)
    bound = 1.0 / jnp.sqrt(jnp.float32(fan_in))
    w = jax.random.uniform(k_w, (fan_in, fan_out), jnp.float32, -bound, bound)
    b = jax.random.uniform(k_b, (1, fan_out), jnp.float32, -bound, bound)
    return w, b


def init_gin_params(key, in_dim, hidden_dim, layers_gin):
    params = []
    for layer in range(layers_gin):
        key, k1, k2 = jax.random.split(key, 3)
        d_in = in_dim if layer == 0 else hidden_dim
        w1, b1 = init_linear(k1, d_in, hidden_dim)
        w2, b2 = init_linear(k2, hidden_dim, hidden_dim)
        gamma = jnp.ones((1, hidden_dim), jnp.float32)
        beta = jnp.zeros((1, hidden_dim), jnp.float32)
        params.append((w1, b1, gamma, beta, w2, b2))
    return params


def pack_params(params, in_dim, hidden_dim):
    """Pack per-layer weights: bf16 [L, K_PAD, F_PAD] (fan-in NOT padded to 128) and an
    f32 (L, 4, F_PAD) vector stack (b1, gamma, beta, b2). Padded lanes/rows are zero."""
    f_pad = -(-max(in_dim, hidden_dim, LANE) // LANE) * LANE          # lane-dense features
    k_pad = -(-max(in_dim, hidden_dim) // 16) * 16                    # bf16 sublane multiple
    w1s, w2s, vecs = [], [], []
    for (w1, b1, gamma, beta, w2, b2) in params:
        w1s.append(jnp.pad(w1, ((0, k_pad - w1.shape[0]), (0, f_pad - w1.shape[1]))))
        w2s.append(jnp.pad(w2, ((0, k_pad - w2.shape[0]), (0, f_pad - w2.shape[1]))))
        vec = jnp.concatenate([b1, gamma, beta, b2], axis=0)          # (4, hidden)
        vecs.append(jnp.pad(vec, ((0, 0), (0, f_pad - vec.shape[1]))))
    w1_stack = jnp.stack(w1s).astype(jnp.bfloat16)
    w2_stack = jnp.stack(w2s).astype(jnp.bfloat16)
    vec_stack = jnp.stack(vecs)                                       # f32 (VPU-side)
    # Invariant guard: padded lanes must stay exactly zero so lanes >= hidden_dim remain
    # zero through BatchNorm and are safely sliced off after the kernel.
    if hidden_dim < f_pad:
        assert bool(jnp.all(vec_stack[:, :, hidden_dim:] == 0.0)), "vec pad not zero"
        assert bool(jnp.all(w1_stack[:, :, hidden_dim:] == 0)), "w1 pad not zero"
        assert bool(jnp.all(w2_stack[:, :, hidden_dim:] == 0)), "w2 pad not zero"
    return w1_stack, w2_stack, vec_stack


def gin_reference(x, a_hat, params, mxu_bf16):
    """Pure-JAX reference. mxu_bf16=True mimics the kernel's bf16 MXU operands exactly;
    mxu_bf16=False is the full-f32 (PyTorch-equivalent) math."""
    def mx(v):
        return v.astype(jnp.bfloat16) if mxu_bf16 else v

    a_op = mx(a_hat.astype(jnp.float32))
    h = x.astype(jnp.float32)
    for layer, (w1, b1, gamma, beta, w2, b2) in enumerate(params):
        if layer > 0:
            h = jnp.maximum(h, 0.0)
        h = jnp.dot(a_op, mx(h), preferred_element_type=jnp.float32)
        z = jnp.dot(mx(h), mx(w1), preferred_element_type=jnp.float32) + b1
        mu = jnp.mean(z, axis=0, keepdims=True)
        var = jnp.mean((z - mu) ** 2, axis=0, keepdims=True)
        zn = (z - mu) * jax.lax.rsqrt(var + BN_EPS) * gamma + beta
        h = jnp.dot(mx(jnp.maximum(zn, 0.0)), mx(w2), preferred_element_type=jnp.float32) + b2
    return h


# ----------------------------------------------------------------------------
if __name__ == "__main__":
    IN_DIM = 8
    HIDDEN_DIM = 32
    LAYERS_GIN = 2
    NUM_NODES = 16
    NUM_GRAPHS = 4          # batched onto the kernel's grid axis

    key = jax.random.PRNGKey(0)
    k_x, k_e, k_p = jax.random.split(key, 3)

    # deterministic node features for each graph
    x = jax.random.normal(k_x, (NUM_GRAPHS, NUM_NODES, IN_DIM), jnp.float32)

    # deterministic per-graph edge_index [2, E]: directed ring + extra directed edges
    a_hats = []
    for g in range(NUM_GRAPHS):
        ring_src = jnp.arange(NUM_NODES, dtype=jnp.int32)
        ring_dst = (ring_src + 1) % NUM_NODES
        extra_src = jax.random.randint(jax.random.fold_in(k_e, g),
                                       (NUM_NODES,), 0, NUM_NODES, jnp.int32)
        extra_dst = (extra_src + 2 + g) % NUM_NODES
        edge_index = jnp.stack(
            [jnp.concatenate([ring_src, extra_src]),
             jnp.concatenate([ring_dst, extra_dst])], axis=0)          # [2, 32]
        a_hats.append(build_mean_adj_hat(edge_index, NUM_NODES))
    a_hat = jnp.stack(a_hats)                                          # [G, N, N] f32

    params = init_gin_params(k_p, IN_DIM, HIDDEN_DIM, LAYERS_GIN)
    w1_stack, w2_stack, vec_stack = pack_params(params, IN_DIM, HIDDEN_DIM)

    h_node = gin_forward(x, a_hat, w1_stack, w2_stack, vec_stack, HIDDEN_DIM)
    jax.block_until_ready(h_node)

    assert h_node.shape == (NUM_GRAPHS, NUM_NODES, HIDDEN_DIM)
    assert h_node.dtype == jnp.float32

    # (1) exact-math check: kernel vs a JAX reference using identical bf16 MXU operands.
    ref_bf16 = jnp.stack([gin_reference(x[g], a_hat[g], params, mxu_bf16=True)
                          for g in range(NUM_GRAPHS)])
    assert jnp.allclose(h_node, ref_bf16, atol=2e-3, rtol=2e-3), \
        float(jnp.max(jnp.abs(h_node - ref_bf16)))

    # (2) semantic check vs the full-f32 (PyTorch-equivalent) math: only the bf16 weight /
    #     activation quantization drift remains, bounded well below 0.15 at these magnitudes.
    ref_f32 = jnp.stack([gin_reference(x[g], a_hat[g], params, mxu_bf16=False)
                         for g in range(NUM_GRAPHS)])
    drift = float(jnp.max(jnp.abs(h_node - ref_f32)))
    assert drift < 0.15, drift

    print("KERNEL_OK")
</pallas_src>

<mosaic_0001>
module attributes {stable_mosaic.version = 11 : i64} {
  func.func @gin_fused_kernel(%arg0: i32, %arg1: memref<1x16x128xbf16, #tpu.memory_space<vmem>>, %arg2: memref<1x16x16xbf16, #tpu.memory_space<vmem>>, %arg3: memref<2x32x128xbf16, #tpu.memory_space<vmem>>, %arg4: memref<2x32x128xbf16, #tpu.memory_space<vmem>>, %arg5: memref<2x4x128xf32, #tpu.memory_space<vmem>>, %arg6: memref<1x16x128xf32, #tpu.memory_space<vmem>>) attributes {dimension_semantics = [#tpu.dimension_semantics<parallel>], iteration_bounds = array<i64: 4>, scalar_prefetch = 0 : i64, scratch_operands = 0 : i64, tpu.core_type = #tpu.core_type<tc>, window_params = [{transform_indices = @transform_0, window_bounds = array<i64: 1, 16, 128>}, {transform_indices = @transform_1, window_bounds = array<i64: 1, 16, 16>}, {pipeline_mode = #tpu.pipeline_mode<synchronous>, transform_indices = @transform_2, window_bounds = array<i64: 2, 32, 128>}, {pipeline_mode = #tpu.pipeline_mode<synchronous>, transform_indices = @transform_3, window_bounds = array<i64: 2, 32, 128>}, {pipeline_mode = #tpu.pipeline_mode<synchronous>, transform_indices = @transform_4, window_bounds = array<i64: 2, 4, 128>}, {transform_indices = @transform_5, window_bounds = array<i64: 1, 16, 128>}]} {
    %c0 = arith.constant 0 : index
    %c0_0 = arith.constant 0 : index
    %c0_1 = arith.constant 0 : index
    %0 = vector.load %arg2[%c0, %c0_0, %c0_1] : memref<1x16x16xbf16, #tpu.memory_space<vmem>>, vector<1x16x16xbf16>
    %1 = vector.shape_cast %0 : vector<1x16x16xbf16> to vector<16x16xbf16>
    %c0_2 = arith.constant 0 : index
    %c0_3 = arith.constant 0 : index
    %c0_4 = arith.constant 0 : index
    %2 = vector.load %arg1[%c0_2, %c0_3, %c0_4] : memref<1x16x128xbf16, #tpu.memory_space<vmem>>, vector<1x16x128xbf16>
    %3 = vector.shape_cast %2 : vector<1x16x128xbf16> to vector<16x128xbf16>
    %4 = arith.extf %3 : vector<16x128xbf16> to vector<16x128xf32>
    %5 = arith.truncf %4 : vector<16x128xf32> to vector<16x128xbf16>
    %cst = arith.constant dense<0.000000e+00> : vector<16x128xf32>
    %6 = tpu.matmul %1, %5, %cst {dimension_numbers = #tpu.dot_dimension_numbers<[1], [0], [0], [1], [0, 0, 1, 1], [], []>} : vector<16x16xbf16>, vector<16x128xbf16>, vector<16x128xf32> -> vector<16x128xf32>
    %c0_5 = arith.constant 0 : index
    %c0_6 = arith.constant 0 : index
    %c0_7 = arith.constant 0 : index
    %7 = vector.load %arg5[%c0_5, %c0_6, %c0_7] : memref<2x4x128xf32, #tpu.memory_space<vmem>>, vector<1x4x128xf32>
    %8 = vector.shape_cast %7 : vector<1x4x128xf32> to vector<4x128xf32>
    %9 = vector.extract_strided_slice %6 {offsets = [0, 0], sizes = [16, 32], strides = [1, 1]} : vector<16x128xf32> to vector<16x32xf32>
    %10 = arith.truncf %9 : vector<16x32xf32> to vector<16x32xbf16>
    %c0_8 = arith.constant 0 : index
    %c0_9 = arith.constant 0 : index
    %c0_10 = arith.constant 0 : index
    %11 = vector.load %arg3[%c0_8, %c0_9, %c0_10] : memref<2x32x128xbf16, #tpu.memory_space<vmem>>, vector<1x32x128xbf16>
    %12 = vector.shape_cast %11 : vector<1x32x128xbf16> to vector<32x128xbf16>
    %cst_11 = arith.constant dense<0.000000e+00> : vector<16x128xf32>
    %13 = tpu.matmul %10, %12, %cst_11 {dimension_numbers = #tpu.dot_dimension_numbers<[1], [0], [0], [1], [0, 0, 1, 1], [], []>} : vector<16x32xbf16>, vector<32x128xbf16>, vector<16x128xf32> -> vector<16x128xf32>
    %14 = vector.extract_strided_slice %8 {offsets = [0, 0], sizes = [1, 128], strides = [1, 1]} : vector<4x128xf32> to vector<1x128xf32>
    %15 = vector.broadcast %14 : vector<1x128xf32> to vector<16x128xf32>
    %16 = arith.addf %13, %15 : vector<16x128xf32>
    %cst_12 = arith.constant dense<0.000000e+00> : vector<128xf32>
    %17 = vector.multi_reduction <add>, %16, %cst_12 [0] : vector<16x128xf32> to vector<128xf32>
    %18 = vector.shape_cast %17 : vector<128xf32> to vector<1x128xf32>
    %cst_13 = arith.constant 1.600000e+01 : f32
    %19 = vector.broadcast %cst_13 : f32 to vector<1x128xf32>
    %20 = arith.divf %18, %19 : vector<1x128xf32>
    %21 = vector.broadcast %20 : vector<1x128xf32> to vector<16x128xf32>
    %22 = arith.subf %16, %21 : vector<16x128xf32>
    %23 = arith.mulf %22, %22 : vector<16x128xf32>
    %cst_14 = arith.constant dense<0.000000e+00> : vector<128xf32>
    %24 = vector.multi_reduction <add>, %23, %cst_14 [0] : vector<16x128xf32> to vector<128xf32>
    %25 = vector.shape_cast %24 : vector<128xf32> to vector<1x128xf32>
    %cst_15 = arith.constant 1.600000e+01 : f32
    %26 = vector.broadcast %cst_15 : f32 to vector<1x128xf32>
    %27 = arith.divf %25, %26 : vector<1x128xf32>
    %28 = vector.extract_strided_slice %8 {offsets = [1, 0], sizes = [1, 128], strides = [1, 1]} : vector<4x128xf32> to vector<1x128xf32>
    %cst_16 = arith.constant 9.99999974E-6 : f32
    %29 = vector.broadcast %cst_16 : f32 to vector<1x128xf32>
    %30 = arith.addf %27, %29 : vector<1x128xf32>
    %31 = math.rsqrt %30 : vector<1x128xf32>
    %32 = arith.mulf %28, %31 : vector<1x128xf32>
    %33 = vector.extract_strided_slice %8 {offsets = [2, 0], sizes = [1, 128], strides = [1, 1]} : vector<4x128xf32> to vector<1x128xf32>
    %34 = arith.mulf %20, %32 : vector<1x128xf32>
    %35 = arith.subf %33, %34 : vector<1x128xf32>
    %36 = vector.broadcast %32 : vector<1x128xf32> to vector<16x128xf32>
    %37 = arith.mulf %16, %36 : vector<16x128xf32>
    %38 = vector.broadcast %35 : vector<1x128xf32> to vector<16x128xf32>
    %39 = arith.addf %37, %38 : vector<16x128xf32>
    %cst_17 = arith.constant 0.000000e+00 : f32
    %40 = vector.broadcast %cst_17 : f32 to vector<16x128xf32>
    %41 = arith.maximumf %39, %40 : vector<16x128xf32>
    %42 = vector.extract_strided_slice %41 {offsets = [0, 0], sizes = [16, 32], strides = [1, 1]} : vector<16x128xf32> to vector<16x32xf32>
    %43 = arith.truncf %42 : vector<16x32xf32> to vector<16x32xbf16>
    %c0_18 = arith.constant 0 : index
    %c0_19 = arith.constant 0 : index
    %c0_20 = arith.constant 0 : index
    %44 = vector.load %arg4[%c0_18, %c0_19, %c0_20] : memref<2x32x128xbf16, #tpu.memory_space<vmem>>, vector<1x32x128xbf16>
    %45 = vector.shape_cast %44 : vector<1x32x128xbf16> to vector<32x128xbf16>
    %cst_21 = arith.constant dense<0.000000e+00> : vector<16x128xf32>
    %46 = tpu.matmul %43, %45, %cst_21 {dimension_numbers = #tpu.dot_dimension_numbers<[1], [0], [0], [1], [0, 0, 1, 1], [], []>} : vector<16x32xbf16>, vector<32x128xbf16>, vector<16x128xf32> -> vector<16x128xf32>
    %47 = vector.extract_strided_slice %8 {offsets = [3, 0], sizes = [1, 128], strides = [1, 1]} : vector<4x128xf32> to vector<1x128xf32>
    %48 = vector.broadcast %47 : vector<1x128xf32> to vector<16x128xf32>
    %49 = arith.addf %46, %48 : vector<16x128xf32>
    %cst_22 = arith.constant 0.000000e+00 : f32
    %50 = vector.broadcast %cst_22 : f32 to vector<16x128xf32>
    %51 = arith.maximumf %49, %50 : vector<16x128xf32>
    %52 = arith.truncf %51 : vector<16x128xf32> to vector<16x128xbf16>
    %cst_23 = arith.constant dense<0.000000e+00> : vector<16x128xf32>
    %53 = tpu.matmul %1, %52, %cst_23 {dimension_numbers = #tpu.dot_dimension_numbers<[1], [0], [0], [1], [0, 0, 1, 1], [], []>} : vector<16x16xbf16>, vector<16x128xbf16>, vector<16x128xf32> -> vector<16x128xf32>
    %c1 = arith.constant 1 : index
    %c0_24 = arith.constant 0 : index
    %c0_25 = arith.constant 0 : index
    %54 = vector.load %arg5[%c1, %c0_24, %c0_25] : memref<2x4x128xf32, #tpu.memory_space<vmem>>, vector<1x4x128xf32>
    %55 = vector.shape_cast %54 : vector<1x4x128xf32> to vector<4x128xf32>
    %56 = vector.extract_strided_slice %53 {offsets = [0, 0], sizes = [16, 32], strides = [1, 1]} : vector<16x128xf32> to vector<16x32xf32>
    %57 = arith.truncf %56 : vector<16x32xf32> to vector<16x32xbf16>
    %c1_26 = arith.constant 1 : index
    %c0_27 = arith.constant 0 : index
    %c0_28 = arith.constant 0 : index
    %58 = vector.load %arg3[%c1_26, %c0_27, %c0_28] : memref<2x32x128xbf16, #tpu.memory_space<vmem>>, vector<1x32x128xbf16>
    %59 = vector.shape_cast %58 : vector<1x32x128xbf16> to vector<32x128xbf16>
    %cst_29 = arith.constant dense<0.000000e+00> : vector<16x128xf32>
    %60 = tpu.matmul %57, %59, %cst_29 {dimension_numbers = #tpu.dot_dimension_numbers<[1], [0], [0], [1], [0, 0, 1, 1], [], []>} : vector<16x32xbf16>, vector<32x128xbf16>, vector<16x128xf32> -> vector<16x128xf32>
    %61 = vector.extract_strided_slice %55 {offsets = [0, 0], sizes = [1, 128], strides = [1, 1]} : vector<4x128xf32> to vector<1x128xf32>
    %62 = vector.broadcast %61 : vector<1x128xf32> to vector<16x128xf32>
    %63 = arith.addf %60, %62 : vector<16x128xf32>
    %cst_30 = arith.constant dense<0.000000e+00> : vector<128xf32>
    %64 = vector.multi_reduction <add>, %63, %cst_30 [0] : vector<16x128xf32> to vector<128xf32>
    %65 = vector.shape_cast %64 : vector<128xf32> to vector<1x128xf32>
    %cst_31 = arith.constant 1.600000e+01 : f32
    %66 = vector.broadcast %cst_31 : f32 to vector<1x128xf32>
    %67 = arith.divf %65, %66 : vector<1x128xf32>
    %68 = vector.broadcast %67 : vector<1x128xf32> to vector<16x128xf32>
    %69 = arith.subf %63, %68 : vector<16x128xf32>
    %70 = arith.mulf %69, %69 : vector<16x128xf32>
    %cst_32 = arith.constant dense<0.000000e+00> : vector<128xf32>
    %71 = vector.multi_reduction <add>, %70, %cst_32 [0] : vector<16x128xf32> to vector<128xf32>
    %72 = vector.shape_cast %71 : vector<128xf32> to vector<1x128xf32>
    %cst_33 = arith.constant 1.600000e+01 : f32
    %73 = vector.broadcast %cst_33 : f32 to vector<1x128xf32>
    %74 = arith.divf %72, %73 : vector<1x128xf32>
    %75 = vector.extract_strided_slice %55 {offsets = [1, 0], sizes = [1, 128], strides = [1, 1]} : vector<4x128xf32> to vector<1x128xf32>
    %cst_34 = arith.constant 9.99999974E-6 : f32
    %76 = vector.broadcast %cst_34 : f32 to vector<1x128xf32>
    %77 = arith.addf %74, %76 : vector<1x128xf32>
    %78 = math.rsqrt %77 : vector<1x128xf32>
    %79 = arith.mulf %75, %78 : vector<1x128xf32>
    %80 = vector.extract_strided_slice %55 {offsets = [2, 0], sizes = [1, 128], strides = [1, 1]} : vector<4x128xf32> to vector<1x128xf32>
    %81 = arith.mulf %67, %79 : vector<1x128xf32>
    %82 = arith.subf %80, %81 : vector<1x128xf32>
    %83 = vector.broadcast %79 : vector<1x128xf32> to vector<16x128xf32>
    %84 = arith.mulf %63, %83 : vector<16x128xf32>
    %85 = vector.broadcast %82 : vector<1x128xf32> to vector<16x128xf32>
    %86 = arith.addf %84, %85 : vector<16x128xf32>
    %cst_35 = arith.constant 0.000000e+00 : f32
    %87 = vector.broadcast %cst_35 : f32 to vector<16x128xf32>
    %88 = arith.maximumf %86, %87 : vector<16x128xf32>
    %89 = vector.extract_strided_slice %88 {offsets = [0, 0], sizes = [16, 32], strides = [1, 1]} : vector<16x128xf32> to vector<16x32xf32>
    %90 = arith.truncf %89 : vector<16x32xf32> to vector<16x32xbf16>
    %c1_36 = arith.constant 1 : index
    %c0_37 = arith.constant 0 : index
    %c0_38 = arith.constant 0 : index
    %91 = vector.load %arg4[%c1_36, %c0_37, %c0_38] : memref<2x32x128xbf16, #tpu.memory_space<vmem>>, vector<1x32x128xbf16>
    %92 = vector.shape_cast %91 : vector<1x32x128xbf16> to vector<32x128xbf16>
    %cst_39 = arith.constant dense<0.000000e+00> : vector<16x128xf32>
    %93 = tpu.matmul %90, %92, %cst_39 {dimension_numbers = #tpu.dot_dimension_numbers<[1], [0], [0], [1], [0, 0, 1, 1], [], []>} : vector<16x32xbf16>, vector<32x128xbf16>, vector<16x128xf32> -> vector<16x128xf32>
    %94 = vector.extract_strided_slice %55 {offsets = [3, 0], sizes = [1, 128], strides = [1, 1]} : vector<4x128xf32> to vector<1x128xf32>
    %95 = vector.broadcast %94 : vector<1x128xf32> to vector<16x128xf32>
    %96 = arith.addf %93, %95 : vector<16x128xf32>
    %c0_40 = arith.constant 0 : index
    %c0_41 = arith.constant 0 : index
    %c0_42 = arith.constant 0 : index
    %97 = vector.load %arg6[%c0_40, %c0_41, %c0_42] : memref<1x16x128xf32, #tpu.memory_space<vmem>>, vector<1x16x128xf32>
    %98 = vector.shape_cast %97 : vector<1x16x128xf32> to vector<16x128xf32>
    %99 = vector.shape_cast %96 : vector<16x128xf32> to vector<1x16x128xf32>
    tpu.vector_store %arg6[%c0_40, %c0_41, %c0_42], %99 {strides = array<i32>} : memref<1x16x128xf32, #tpu.memory_space<vmem>>, vector<1x16x128xf32>,
    return
  }
  func.func @transform_0(%arg0: i32) -> (i32, i32, i32) {
    %c0_i32 = arith.constant 0 : i32
    %c0_i32_0 = arith.constant 0 : i32
    %c0_i32_1 = arith.constant 0 : i32
    return %arg0, %c0_i32, %c0_i32_0 : i32, i32, i32
  }
  func.func @transform_1(%arg0: i32) -> (i32, i32, i32) {
    %c0_i32 = arith.constant 0 : i32
    %c0_i32_0 = arith.constant 0 : i32
    %c0_i32_1 = arith.constant 0 : i32
    return %arg0, %c0_i32, %c0_i32_0 : i32, i32, i32
  }
  func.func @transform_2(%arg0: i32) -> (i32, i32, i32) {
    %c0_i32 = arith.constant 0 : i32
    %c0_i32_0 = arith.constant 0 : i32
    %c0_i32_1 = arith.constant 0 : i32
    %c0_i32_2 = arith.constant 0 : i32
    return %c0_i32, %c0_i32_0, %c0_i32_1 : i32, i32, i32
  }
  func.func @transform_3(%arg0: i32) -> (i32, i32, i32) {
    %c0_i32 = arith.constant 0 : i32
    %c0_i32_0 = arith.constant 0 : i32
    %c0_i32_1 = arith.constant 0 : i32
    %c0_i32_2 = arith.constant 0 : i32
    return %c0_i32, %c0_i32_0, %c0_i32_1 : i32, i32, i32
  }
  func.func @transform_4(%arg0: i32) -> (i32, i32, i32) {
    %c0_i32 = arith.constant 0 : i32
    %c0_i32_0 = arith.constant 0 : i32
    %c0_i32_1 = arith.constant 0 : i32
    %c0_i32_2 = arith.constant 0 : i32
    return %c0_i32, %c0_i32_0, %c0_i32_1 : i32, i32, i32
  }
  func.func @transform_5(%arg0: i32) -> (i32, i32, i32) {
    %c0_i32 = arith.constant 0 : i32
    %c0_i32_0 = arith.constant 0 : i32
    %c0_i32_1 = arith.constant 0 : i32
    return %arg0, %c0_i32, %c0_i32_0 : i32, i32, i32
  }
}

</mosaic_0001>

<llo_original>
// kernel: tpu_custom_call.1
$region0: #{tpu_custom_call.1}
  #allocation0 [shape = 'u32[]', space=smem, size = 0x4, offset = 0x4, fixed_abs, tag = 'smem constant byte address 0x4 - core index']
  #allocation1 [shape = 'u32[144,128]{1,0:T(1,128)}', space=vmem, size = 0x12000, scoped, tag = 'internal scratch']
  %s0 = inlined_call_operand.hbm [shape: bf16[4,16,128], index: 0, kind: input, shape index: {}]
  %s1 = inlined_call_operand.hbm [shape: bf16[4,16,16], index: 1, kind: input, shape index: {}]
  %s2 = inlined_call_operand.hbm [shape: bf16[2,32,128], index: 2, kind: input, shape index: {}]
  %s3 = inlined_call_operand.hbm [shape: bf16[2,32,128], index: 3, kind: input, shape index: {}]
  %s4 = inlined_call_operand.hbm [shape: f32[2,4,128], index: 4, kind: input, shape index: {}]
  %s5 = inlined_call_operand.hbm [shape: f32[4,16,128], index: 5, kind: output, shape index: {}]
  %s6 = sld [smem:[#allocation0]]
  $region73: #{tpu_custom_call.1} parent=0
    _
  %s8 = ssub.s32 1, %s6
  %s9 = scalar_select 0, %s8, %s6
  $region1: #{tpu_custom_call.1} parent=0
    #allocation2 [shape = 'u8[8192]{0}', space=vmem, size = 0x2000, scoped, tag = 'input window, operand 0']
    #allocation3 [shape = 's32[2]{0}', space=sflag, size = 0x8, scoped, tag = 'scoped memory for tpu_custom_call.1']
    #allocation4 [shape = 's32[2]{0}', space=sflag, size = 0x8, scoped, tag = 'scoped memory for tpu_custom_call.1']
    #allocation5 [shape = 'u8[8192]{0}', space=vmem, size = 0x2000, scoped, tag = 'input window, operand 1']
    #allocation6 [shape = 's32[2]{0}', space=sflag, size = 0x8, scoped, tag = 'scoped memory for tpu_custom_call.1']
    #allocation7 [shape = 'u8[16384]{0}', space=vmem, size = 0x4000, scoped, tag = 'input window, operand 2, single buffered']
    #allocation8 [shape = 'u8[16384]{0}', space=vmem, size = 0x4000, scoped, tag = 'input window, operand 3, single buffered']
    #allocation9 [shape = 's32[1]{0}', space=sflag, size = 0x4, scoped, tag = 'scoped memory for tpu_custom_call.1']
    #allocation10 [shape = 'u8[4096]{0}', space=vmem, size = 0x1000, scoped, tag = 'input window, operand 4, single buffered']
    #allocation11 [shape = 'u8[16384]{0}', space=vmem, size = 0x4000, scoped, tag = 'output window, operand 0']
    %10 = vsyncpa [#allocation3], 0
    %s11 = scalar_lea.sflag [#allocation3], 1
    %12 = vsyncpa %s11, 0
    %13 = vsyncpa [#allocation6], 0
    %s14 = scalar_lea.sflag [#allocation6], 1
    %15 = vsyncpa %s14, 0
    %16 = vsyncpa [#allocation9], 0
    %17 = vsyncpa [#allocation4], 0
    %s18 = scalar_lea.sflag [#allocation4], 1
    %19 = vsyncpa %s18, 0
    loop: start=0, step=1, limit=6
    $region2: #{tpu_custom_call.1} parent=1 // loop_pre_header
      _
    $region3: #{tpu_custom_call.1} parent=1 // loop_header
      %s21 = sphi 0, %s25
      %p22 = scmp.ge.s32.totalorder %s21, 6
      %s31 = sphi 0, %s33
      %s34 = sphi 0, %s31
      %s35 = sphi 0, %s34
      %s51 = sphi 0, %s35
      %s57 = sphi 0, %s59
      %s60 = sphi 0, %s57
      %s61 = sphi 0, %s60
      %s77 = sphi 0, %s61
      %s81 = sphi 0, %s81
      %s83 = sphi 0, %s81
      %s84 = sphi 0, %s83
      %s98 = sphi 0, %s84
      %s102 = sphi 0, %s102
      %s104 = sphi 0, %s102
      %s105 = sphi 0, %s104
      %s119 = sphi 0, %s105
      %s123 = sphi 0, %s123
      %s125 = sphi 0, %s123
      %s126 = sphi 0, %s125
      %s140 = sphi 0, %s126
      %s146 = sphi 0, %s148
      %s149 = sphi 0, %s146
      %s150 = sphi 0, %s149
      %s166 = sphi 0, %s150
    $region4: #{tpu_custom_call.1} parent=1 // loop_header_branch
      %24 = sbr.rel (%p22) target = $region8
    $region5: #{tpu_custom_call.1} parent=1 // loop_body
      %s26 = ssub.s32 %s21, 1
      %s27 = ssub.s32 %s21, 2
      %s28 = sadd.s32 %s21, 1
      %s29 = ssub.s32 %s21, %s28
      %p30 = scmp.eq.s32.totalorder %s29, 0
      %s32 = sadd.s32 %s31, 1
      %s33 = scalar_select %p30, %s31, %s32
      %p36 = pneg %p30
      %p37 = scmp.eq.s32.totalorder %s21, 3
      %p38 = por %p36, %p37
      %p39 = scmp.ne.s32.totalorder %s31, %s34
      %p40 = scmp.eq.s32.totalorder %s21, 0
      %p41 = por %p39, %p40
      %p42 = scmp.ne.s32.totalorder %s31, %s34
      %p43 = scmp.eq.s32.totalorder %s26, 3
      %p44 = por %p42, %p43
      %p45 = scmp.ne.s32.totalorder %s34, %s35
      %p46 = scmp.eq.s32.totalorder %s26, 0
      %p47 = por %p45, %p46
      %p48 = scmp.ne.s32.totalorder %s34, %s35
      %p49 = scmp.eq.s32.totalorder %s27, 3
      %p50 = por %p48, %p49
      %p52 = scmp.ne.s32.totalorder %s35, %s51
      %p53 = scmp.eq.s32.totalorder %s27, 0
      %p54 = por %p52, %p53
      %s55 = ssub.s32 %s21, %s28
      %p56 = scmp.eq.s32.totalorder %s55, 0
      %s58 = sadd.s32 %s57, 1
      %s59 = scalar_select %p56, %s57, %s58
      %p62 = pneg %p56
      %p63 = scmp.eq.s32.totalorder %s21, 3
      %p64 = por %p62, %p63
      %p65 = scmp.ne.s32.totalorder %s57, %s60
      %p66 = scmp.eq.s32.totalorder %s21, 0
      %p67 = por %p65, %p66
      %p68 = scmp.ne.s32.totalorder %s57, %s60
      %p69 = scmp.eq.s32.totalorder %s26, 3
      %p70 = por %p68, %p69
      %p71 = scmp.ne.s32.totalorder %s60, %s61
      %p72 = scmp.eq.s32.totalorder %s26, 0
      %p73 = por %p71, %p72
      %p74 = scmp.ne.s32.totalorder %s60, %s61
      %p75 = scmp.eq.s32.totalorder %s27, 3
      %p76 = por %p74, %p75
      %p78 = scmp.ne.s32.totalorder %s61, %s77
      %p79 = scmp.eq.s32.totalorder %s27, 0
      %p80 = por %p78, %p79
      %s82 = sadd.s32 %s81, 1
      %p85 = scmp.eq.s32.totalorder %s21, 3
      %p86 = scmp.ne.s32.totalorder %s81, %s83
      %p87 = scmp.eq.s32.totalorder %s21, 0
      %p88 = por %p86, %p87
      %p89 = scmp.ne.s32.totalorder %s81, %s83
      %p90 = scmp.eq.s32.totalorder %s26, 3
      %p91 = por %p89, %p90
      %p92 = scmp.ne.s32.totalorder %s83, %s84
      %p93 = scmp.eq.s32.totalorder %s26, 0
      %p94 = por %p92, %p93
      %p95 = scmp.ne.s32.totalorder %s83, %s84
      %p96 = scmp.eq.s32.totalorder %s27, 3
      %p97 = por %p95, %p96
      %p99 = scmp.ne.s32.totalorder %s84, %s98
      %p100 = scmp.eq.s32.totalorder %s27, 0
      %p101 = por %p99, %p100
      %s103 = sadd.s32 %s102, 1
      %p106 = scmp.eq.s32.totalorder %s21, 3
      %p107 = scmp.ne.s32.totalorder %s102, %s104
      %p108 = scmp.eq.s32.totalorder %s21, 0
      %p109 = por %p107, %p108
      %p110 = scmp.ne.s32.totalorder %s102, %s104
      %p111 = scmp.eq.s32.totalorder %s26, 3
      %p112 = por %p110, %p111
      %p113 = scmp.ne.s32.totalorder %s104, %s105
      %p114 = scmp.eq.s32.totalorder %s26, 0
      %p115 = por %p113, %p114
      %p116 = scmp.ne.s32.totalorder %s104, %s105
      %p117 = scmp.eq.s32.totalorder %s27, 3
      %p118 = por %p116, %p117
      %p120 = scmp.ne.s32.totalorder %s105, %s119
      %p121 = scmp.eq.s32.totalorder %s27, 0
      %p122 = por %p120, %p121
      %s124 = sadd.s32 %s123, 1
      %p127 = scmp.eq.s32.totalorder %s21, 3
      %p128 = scmp.ne.s32.totalorder %s123, %s125
      %p129 = scmp.eq.s32.totalorder %s21, 0
      %p130 = por %p128, %p129
      %p131 = scmp.ne.s32.totalorder %s123, %s125
      %p132 = scmp.eq.s32.totalorder %s26, 3
      %p133 = por %p131, %p132
      %p134 = scmp.ne.s32.totalorder %s125, %s126
      %p135 = scmp.eq.s32.totalorder %s26, 0
      %p136 = por %p134, %p135
      %p137 = scmp.ne.s32.totalorder %s125, %s126
      %p138 = scmp.eq.s32.totalorder %s27, 3
      %p139 = por %p137, %p138
      %p141 = scmp.ne.s32.totalorder %s126, %s140
      %p142 = scmp.eq.s32.totalorder %s27, 0
      %p143 = por %p141, %p142
      %s144 = ssub.s32 %s21, %s28
      %p145 = scmp.eq.s32.totalorder %s144, 0
      %s147 = sadd.s32 %s146, 1
      %s148 = scalar_select %p145, %s146, %s147
      %p151 = pneg %p145
      %p152 = scmp.eq.s32.totalorder %s21, 3
      %p153 = por %p151, %p152
      %p154 = scmp.ne.s32.totalorder %s146, %s149
      %p155 = scmp.eq.s32.totalorder %s21, 0
      %p156 = por %p154, %p155
      %p157 = scmp.ne.s32.totalorder %s146, %s149
      %p158 = scmp.eq.s32.totalorder %s26, 3
      %p159 = por %p157, %p158
      %p160 = scmp.ne.s32.totalorder %s149, %s150
      %p161 = scmp.eq.s32.totalorder %s26, 0
      %p162 = por %p160, %p161
      %p163 = scmp.ne.s32.totalorder %s149, %s150
      %p164 = scmp.eq.s32.totalorder %s27, 3
      %p165 = por %p163, %p164
      %p167 = scmp.ne.s32.totalorder %s150, %s166
      %p168 = scmp.eq.s32.totalorder %s27, 0
      %p169 = por %p167, %p168
      %p170 = scmp.le.s32.totalorder 1, %s21
      %p171 = scmp.lt.s32.totalorder %s21, 5
      %p172 = pnand %p170, %p171
      %p173 = pneg %p172
      // Predicated region
      $region9: #{tpu_custom_call.1} parent=5 // pred_check
        _
      $region10: #{tpu_custom_call.1} parent=5 // pred_check_branch
        %175 = sbr.rel (%p172) target = $region12
      $region11: #{tpu_custom_call.1} parent=5 // pred_region
        %s176 = ssub.s32 %s21, 1
        // Predicated region
        $region13: #{tpu_custom_call.1} parent=11 // pred_check
          %p177 = pneg %p94
        $region14: #{tpu_custom_call.1} parent=11 // pred_check_branch
          %179 = sbr.rel (%p177) target = $region16
        $region15: #{tpu_custom_call.1} parent=11 // pred_region
          %s181 = ssub.s32 512, 512
          %182 = vsyncadd [#allocation6], %s181
          %s183 = sshll.u32 [#allocation7], 4
          %s184 = int_to_ptr.vmem [resolvable:$true] %s183
          %189 = dma.hbm_to_vmem [thread:$0]  %s2, 512, %s184, [#allocation6], 64, 64, 4
        $region16: #{tpu_custom_call.1} parent=11 // pred_fallthru
          _
        // Predicated region
        $region17: #{tpu_custom_call.1} parent=11 // pred_check
          %p190 = pneg %p115
        $region18: #{tpu_custom_call.1} parent=11 // pred_check_branch
          %192 = sbr.rel (%p190) target = $region20
        $region19: #{tpu_custom_call.1} parent=11 // pred_region
          %s194 = ssub.s32 512, 512
          %195 = vsyncadd [#allocation9], %s194
          %s196 = sshll.u32 [#allocation8], 4
          %s197 = int_to_ptr.vmem [resolvable:$true] %s196
          %202 = dma.hbm_to_vmem [thread:$0]  %s3, 512, %s197, [#allocation9], 64, 64, 4
        $region20: #{tpu_custom_call.1} parent=11 // pred_fallthru
          _
        // Predicated region
        $region21: #{tpu_custom_call.1} parent=11 // pred_check
          %p203 = pneg %p136
        $region22: #{tpu_custom_call.1} parent=11 // pred_check_branch
          %205 = sbr.rel (%p203) target = $region24
        $region23: #{tpu_custom_call.1} parent=11 // pred_region
          %s207 = ssub.s32 128, 128
          %208 = vsyncadd [#allocation9], %s207
          %s209 = sshll.u32 [#allocation10], 4
          %s210 = int_to_ptr.vmem [resolvable:$true] %s209
          %215 = dma.hbm_to_vmem [thread:$0]  %s4, 128, %s210, [#allocation9], 64, 64, 4
        $region24: #{tpu_custom_call.1} parent=11 // pred_fallthru
          _
      $region12: #{tpu_custom_call.1} parent=5 // pred_fallthru
        _
      %p216 = scmp.lt.s32.totalorder %s21, 4
      // Predicated region
      $region25: #{tpu_custom_call.1} parent=5 // pred_check
        %p217 = pneg %p216
      $region26: #{tpu_custom_call.1} parent=5 // pred_check_branch
        %219 = sbr.rel (%p217) target = $region28
      $region27: #{tpu_custom_call.1} parent=5 // pred_region
        // Predicated region
        $region29: #{tpu_custom_call.1} parent=27 // pred_check
          %p220 = pneg %p41
        $region30: #{tpu_custom_call.1} parent=27 // pred_check_branch
          %222 = sbr.rel (%p220) target = $region32
        $region31: #{tpu_custom_call.1} parent=27 // pred_region
          %s223 = sand.u32 %s31, 1
          %s224 = scalar_lea.sflag [#allocation3], %s223
          %s225 = sand.u32 %s31, 1
          %s226 = smul.addr %s225, 8
          %s227 = scalar_lea.vmem [#allocation2], %s226
          %s229 = ssub.s32 128, 128
          %230 = vsyncadd %s224, %s229
          %s231 = smul.addr %s21, 2
          %s232 = smul.addr %s231, 64
          %s233 = scalar_lea.hbm %s0, %s232
          %s234 = sshll.u32 %s227, 4
          %s235 = int_to_ptr.vmem [resolvable:$true] %s234
          %240 = dma.hbm_to_vmem [thread:$0]  %s233, 128, %s235, %s224, 64, 64, 4
        $region32: #{tpu_custom_call.1} parent=27 // pred_fallthru
          _
        // Predicated region
        $region33: #{tpu_custom_call.1} parent=27 // pred_check
          %p241 = pneg %p67
        $region34: #{tpu_custom_call.1} parent=27 // pred_check_branch
          %243 = sbr.rel (%p241) target = $region36
        $region35: #{tpu_custom_call.1} parent=27 // pred_region
          %s244 = sand.u32 %s21, 1
          %s245 = scalar_lea.sflag [#allocation6], %s244
          %s246 = sand.u32 %s57, 1
          %s247 = smul.addr %s246, 8
          %s248 = scalar_lea.vmem [#allocation5], %s247
          %s250 = ssub.s32 128, 128
          %251 = vsyncadd %s245, %s250
          %s252 = smul.addr %s21, 2
          %s253 = smul.addr %s252, 64
          %s254 = scalar_lea.hbm %s1, %s253
          %s255 = sshll.u32 %s248, 4
          %s256 = int_to_ptr.vmem [resolvable:$true] %s255
          %261 = dma.hbm_to_vmem [thread:$0]  %s254, 128, %s256, %s245, 64, 64, 4
        $region36: #{tpu_custom_call.1} parent=27 // pred_fallthru
          _
      $region28: #{tpu_custom_call.1} parent=5 // pred_fallthru
        _
      %p262 = scmp.le.s32.totalorder 1, %s21
      %p263 = scmp.lt.s32.totalorder %s21, 5
      %p264 = pnand %p262, %p263
      %p265 = pneg %p264
      // Predicated region
      $region37: #{tpu_custom_call.1} parent=5 // pred_check
        _
      $region38: #{tpu_custom_call.1} parent=5 // pred_check_branch
        %267 = sbr.rel (%p264) target = $region40
      $region39: #{tpu_custom_call.1} parent=5 // pred_region
        %s268 = ssub.s32 %s21, 1
        %s269 = sand.u32 %s34, 1
        %s270 = scalar_lea.sflag [#allocation3], %s269
        %s271 = sand.u32 %s34, 1
        %s272 = smul.addr %s271, 8
        %s273 = scalar_lea.vmem [#allocation2], %s272
        // Predicated region
        $region41: #{tpu_custom_call.1} parent=39 // pred_check
          %p274 = pneg %p47
        $region42: #{tpu_custom_call.1} parent=39 // pred_check_branch
          %276 = sbr.rel (%p274) target = $region44
        $region43: #{tpu_custom_call.1} parent=39 // pred_region
          %277 = dma.done %s270, 128
        $region44: #{tpu_custom_call.1} parent=39 // pred_fallthru
          _
        %s278 = sand.u32 %s26, 1
        %s279 = scalar_lea.sflag [#allocation6], %s278
        %s280 = sand.u32 %s60, 1
        %s281 = smul.addr %s280, 8
        %s282 = scalar_lea.vmem [#allocation5], %s281
        // Predicated region
        $region45: #{tpu_custom_call.1} parent=39 // pred_check
          %p283 = pneg %p73
        $region46: #{tpu_custom_call.1} parent=39 // pred_check_branch
          %285 = sbr.rel (%p283) target = $region48
        $region47: #{tpu_custom_call.1} parent=39 // pred_region
          %286 = dma.done %s279, 128
        $region48: #{tpu_custom_call.1} parent=39 // pred_fallthru
          _
        // Predicated region
        $region49: #{tpu_custom_call.1} parent=39 // pred_check
          %p287 = pneg %p94
        $region50: #{tpu_custom_call.1} parent=39 // pred_check_branch
          %289 = sbr.rel (%p287) target = $region52
        $region51: #{tpu_custom_call.1} parent=39 // pred_region
          %290 = dma.done [#allocation6], 512
        $region52: #{tpu_custom_call.1} parent=39 // pred_fallthru
          _
        // Predicated region
        $region53: #{tpu_custom_call.1} parent=39 // pred_check
          %p291 = pneg %p115
        $region54: #{tpu_custom_call.1} parent=39 // pred_check_branch
          %293 = sbr.rel (%p291) target = $region56
        $region55: #{tpu_custom_call.1} parent=39 // pred_region
          %294 = dma.done [#allocation9], 512
        $region56: #{tpu_custom_call.1} parent=39 // pred_fallthru
          _
        // Predicated region
        $region57: #{tpu_custom_call.1} parent=39 // pred_check
          %p295 = pneg %p136
        $region58: #{tpu_custom_call.1} parent=39 // pred_check_branch
          %297 = sbr.rel (%p295) target = $region60
        $region59: #{tpu_custom_call.1} parent=39 // pred_region
          %298 = dma.done [#allocation9], 128
        $region60: #{tpu_custom_call.1} parent=39 // pred_fallthru
          _
        %s299 = sand.u32 %s34, 1
        %s300 = scalar_lea.sflag [#allocation3], %s299
        %s301 = sand.u32 %s34, 1
        %s302 = smul.addr %s301, 8
        %s303 = scalar_lea.vmem [#allocation2], %s302
        %p304 = pneg %p47
        %p305 = pneg %p44
        %s306 = sand.u32 %s26, 1
        %s307 = scalar_lea.sflag [#allocation6], %s306
        %s308 = sand.u32 %s60, 1
        %s309 = smul.addr %s308, 8
        %s310 = scalar_lea.vmem [#allocation5], %s309
        %p311 = pneg %p73
        %p312 = pneg %p70
        %p313 = pneg %p94
        %p314 = pneg %p91
        %p315 = pneg %p115
        %p316 = pneg %p112
        %p317 = pneg %p136
        %p318 = pneg %p133
        %p319 = pneg %p162
        %p320 = pneg %p159
        %s321 = sand.u32 %s149, 1
        %s322 = scalar_lea.sflag [#allocation4], %s321
        %s323 = sand.u32 %s149, 1
        %s324 = smul.addr %s323, 16
        %s325 = scalar_lea.vmem [#allocation11], %s324
        %v327 = vld [vmem:[%s282] sm:$0xf]
        %v328 = vld [vmem:[%s282 + $0x4] sm:$0xf]
        %v329 = vld [vmem:[%s273] sm:$0xf]
        %v330 = vld [vmem:[%s273 + $0x4] sm:$0xf]
        %v333 = vunpack.c.l.b16 %v327
        %v334 = vunpack.c.l.b16 %v328
        %v335 = vpack.c.b16 %v334, %v333
        %v338 = vunpack.c.l.b16 %v329
        %v339 = vunpack.c.l.b16 %v330
        %v340 = vpack.c.b16 %v339, %v338
        %vm342 = vcmask 130048
        %v344 = vsel %vm342, %v335, 0
        %346 = vmatprep.subr.bf16.mxu0 0
        %347 = vmatpush1.bf16.msra.mxu0 0
        %348 = vmatprep.subr.bf16.mxu0 0
        %349 = vmatpush1.bf16.msra.mxu0 0
        %350 = vmatprep.subr.bf16.mxu0 0
        %351 = vmatpush1.bf16.msra.mxu0 0
        %352 = vmatprep.subr.bf16.mxu0 0
        %353 = vmatpush1.bf16.msra.mxu0 0
        %354 = vmatprep.subr.bf16.mxu0 0
        %355 = vmatpush1.bf16.msra.mxu0 0
        %356 = vmatprep.subr.bf16.mxu0 0
        %357 = vmatpush1.bf16.msra.mxu0 0
        %358 = vmatprep.subr.bf16.mxu0 0
        %359 = vmatpush1.bf16.msra.mxu0 0
        %360 = vmatprep.subr.bf16.mxu0 0
        %361 = vmatpush1.bf16.msra.mxu0 %v340
        %362 = vmatprep.subr.bf16.mxu0 0
        %363 = vmatpush2.bf16.msra.mxu0 0
        %364 = vmatprep.subr.bf16.mxu0 0
        %365 = vmatpush2.bf16.msra.mxu0 0
        %366 = vmatprep.subr.bf16.mxu0 0
        %367 = vmatpush2.bf16.msra.mxu0 0
        %368 = vmatprep.subr.bf16.mxu0 0
        %369 = vmatpush2.bf16.msra.mxu0 0
        %370 = vmatprep.subr.bf16.mxu0 0
        %371 = vmatpush2.bf16.msra.mxu0 0
        %372 = vmatprep.subr.bf16.mxu0 0
        %373 = vmatpush2.bf16.msra.mxu0 0
        %374 = vmatprep.subr.bf16.mxu0 0
        %375 = vmatpush2.bf16.msra.mxu0 0
        %376 = vmatprep.subr.bf16.mxu0 0
        %377 = vmatpush2.bf16.msra.mxu0 0
        %378 = vmatprep.mubr.bf16.mxu0 0
        %379 = vmatmul.mubr.bf16.gmra.mxu0 %v344
        %v380 = vpop.f32.mrf.mxu0
        %v381 = vadd.f32 0.0, %v380
        %v382 = vpop.f32.mrf.mxu0
        %v383 = vpop.f32.mrf.mxu0
        %v384 = vadd.f32 0.0, %v383
        %v385 = vpop.f32.mrf.mxu0
        %386 = vdwg.mxu0
        %v387 = vld [vmem:[#allocation10] sm:$0xf]
        %v388 = vpack.c.bf16 %v384, %v381
        %v389 = vld [vmem:[#allocation7] sm:$0xf]
        %v390 = vld [vmem:[#allocation7 + $0x4] sm:$0xf]
        %v391 = vld [vmem:[#allocation7 + $0x8] sm:$0xf]
        %v392 = vld [vmem:[#allocation7 + $0xc] sm:$0xf]
        %v393 = vlaneseq
        %v394 = vshrl.u32 %v393, 7
        %v395 = vsub.s32 0, %v394
        %v396 = vrot.slane %v387, %v395
        %v401 = vunpack.c.l.b16 %v389
        %v402 = vunpack.c.l.b16 %v390
        %v403 = vunpack.c.l.b16 %v391
        %v404 = vunpack.c.l.b16 %v392
        %v405 = vpack.c.b16 %v402, %v401
        %v406 = vpack.c.b16 %v404, %v403
        %vm409 = vcmask 261120
        %v411 = vsel %vm409, %v388, 0
        %413 = vmatprep.subr.bf16.mxu0 0
        %414 = vmatpush1.bf16.msra.mxu0 0
        %415 = vmatprep.subr.bf16.mxu0 0
        %416 = vmatpush1.bf16.msra.mxu0 0
        %417 = vmatprep.subr.bf16.mxu0 0
        %418 = vmatpush1.bf16.msra.mxu0 0
        %419 = vmatprep.subr.bf16.mxu0 0
        %420 = vmatpush1.bf16.msra.mxu0 0
        %421 = vmatprep.subr.bf16.mxu0 0
        %422 = vmatpush1.bf16.msra.mxu0 0
        %423 = vmatprep.subr.bf16.mxu0 0
        %424 = vmatpush1.bf16.msra.mxu0 0
        %425 = vmatprep.subr.bf16.mxu0 0
        %426 = vmatpush1.bf16.msra.mxu0 %v406
        %427 = vmatprep.subr.bf16.mxu0 0
        %428 = vmatpush1.bf16.msra.mxu0 %v405
        %429 = vmatprep.subr.bf16.mxu0 0
        %430 = vmatpush2.bf16.msra.mxu0 0
        %431 = vmatprep.subr.bf16.mxu0 0
        %432 = vmatpush2.bf16.msra.mxu0 0
        %433 = vmatprep.subr.bf16.mxu0 0
        %434 = vmatpush2.bf16.msra.mxu0 0
        %435 = vmatprep.subr.bf16.mxu0 0
        %436 = vmatpush2.bf16.msra.mxu0 0
        %437 = vmatprep.subr.bf16.mxu0 0
        %438 = vmatpush2.bf16.msra.mxu0 0
        %439 = vmatprep.subr.bf16.mxu0 0
        %440 = vmatpush2.bf16.msra.mxu0 0
        %441 = vmatprep.subr.bf16.mxu0 0
        %442 = vmatpush2.bf16.msra.mxu0 0
        %443 = vmatprep.subr.bf16.mxu0 0
        %444 = vmatpush2.bf16.msra.mxu0 0
        %445 = vmatprep.mubr.bf16.mxu0 0
        %446 = vmatmul.mubr.bf16.gmra.mxu0 %v411
        %v447 = vpop.f32.mrf.mxu0
        %v448 = vadd.f32 %v396, %v447
        %v449 = vpop.f32.mrf.mxu0
        %v450 = vpop.f32.mrf.mxu0
        %v451 = vadd.f32 %v396, %v450
        %v452 = vpop.f32.mrf.mxu0
        %453 = vdwg.mxu0
        %v454 = vadd.f32 %v448, %v451
        %v455 = vrot.slane %v454, 4
        %v456 = vadd.f32 %v454, %v455
        %v457 = vrot.slane %v456, 2
        %v458 = vadd.f32 %v456, %v457
        %v459 = vrot.slane %v458, 1
        %v460 = vadd.f32 %v458, %v459
        %v461 = vrcp.pop 16.0
        %v462 = vmul.f32 %v460, %v461
        %v463 = vsub.f32 %v448, %v462
        %v464 = vsub.f32 %v451, %v462
        %v465 = vmul.f32 %v463, %v463
        %v466 = vmul.f32 %v464, %v464
        %v467 = vadd.f32 %v465, %v466
        %v468 = vrot.slane %v467, 4
        %v469 = vadd.f32 %v467, %v468
        %v470 = vrot.slane %v469, 2
        %v471 = vadd.f32 %v469, %v470
        %v472 = vrot.slane %v471, 1
        %v473 = vadd.f32 %v471, %v472
        %v474 = vmul.f32 %v473, %v461
        %v475 = vadd.f32 %v474, 1e-05
        %v476 = vrsqrt.pop %v475
        %v477 = vmul.f32 %v387, %v476
        %v478 = vmul.f32 %v462, %v477
        %v480 = vrot.slane %v478, 7
        %v482 = vsub.f32 %v387, %v480
        %v483 = vlaneseq
        %v484 = vshrl.u32 %v483, 7
        %v485 = vsub.s32 1, %v484
        %v486 = vrot.slane %v477, %v485
        %v487 = vmul.f32 %v448, %v486
        %v488 = vmul.f32 %v451, %v486
        %v489 = vlaneseq
        %v490 = vshrl.u32 %v489, 7
        %v491 = vsub.s32 2, %v490
        %v492 = vrot.slane %v482, %v491
        %v493 = vadd.f32 %v487, %v492
        %v494 = vadd.f32 %v488, %v492
        %v495 = vmax.f32 %v493, 0.0
        %v496 = vmax.f32 %v494, 0.0
        %v497 = vpack.c.bf16 %v496, %v495
        %v498 = vld [vmem:[#allocation8] sm:$0xf]
        %v499 = vld [vmem:[#allocation8 + $0x4] sm:$0xf]
        %v500 = vld [vmem:[#allocation8 + $0x8] sm:$0xf]
        %v501 = vld [vmem:[#allocation8 + $0xc] sm:$0xf]
        %v502 = vlaneseq
        %v503 = vshrl.u32 %v502, 7
        %v504 = vsub.s32 3, %v503
        %v505 = vrot.slane %v387, %v504
        %v510 = vunpack.c.l.b16 %v498
        %v511 = vunpack.c.l.b16 %v499
        %v512 = vunpack.c.l.b16 %v500
        %v513 = vunpack.c.l.b16 %v501
        %v514 = vpack.c.b16 %v511, %v510
        %v515 = vpack.c.b16 %v513, %v512
        %v519 = vsel %vm409, %v497, 0
        %521 = vmatprep.subr.bf16.mxu0 0
        %522 = vmatpush1.bf16.msra.mxu0 0
        %523 = vmatprep.subr.bf16.mxu0 0
        %524 = vmatpush1.bf16.msra.mxu0 0
        %525 = vmatprep.subr.bf16.mxu0 0
        %526 = vmatpush1.bf16.msra.mxu0 0
        %527 = vmatprep.subr.bf16.mxu0 0
        %528 = vmatpush1.bf16.msra.mxu0 0
        %529 = vmatprep.subr.bf16.mxu0 0
        %530 = vmatpush1.bf16.msra.mxu0 0
        %531 = vmatprep.subr.bf16.mxu0 0
        %532 = vmatpush1.bf16.msra.mxu0 0
        %533 = vmatprep.subr.bf16.mxu0 0
        %534 = vmatpush1.bf16.msra.mxu0 %v515
        %535 = vmatprep.subr.bf16.mxu0 0
        %536 = vmatpush1.bf16.msra.mxu0 %v514
        %537 = vmatprep.subr.bf16.mxu0 0
        %538 = vmatpush2.bf16.msra.mxu0 0
        %539 = vmatprep.subr.bf16.mxu0 0
        %540 = vmatpush2.bf16.msra.mxu0 0
        %541 = vmatprep.subr.bf16.mxu0 0
        %542 = vmatpush2.bf16.msra.mxu0 0
        %543 = vmatprep.subr.bf16.mxu0 0
        %544 = vmatpush2.bf16.msra.mxu0 0
        %545 = vmatprep.subr.bf16.mxu0 0
        %546 = vmatpush2.bf16.msra.mxu0 0
        %547 = vmatprep.subr.bf16.mxu0 0
        %548 = vmatpush2.bf16.msra.mxu0 0
        %549 = vmatprep.subr.bf16.mxu0 0
        %550 = vmatpush2.bf16.msra.mxu0 0
        %551 = vmatprep.subr.bf16.mxu0 0
        %552 = vmatpush2.bf16.msra.mxu0 0
        %553 = vmatprep.mubr.bf16.mxu0 0
        %554 = vmatmul.mubr.bf16.gmra.mxu0 %v519
        %v555 = vpop.f32.mrf.mxu0
        %v556 = vadd.f32 %v505, %v555
        %v557 = vpop.f32.mrf.mxu0
        %v558 = vpop.f32.mrf.mxu0
        %v559 = vadd.f32 %v505, %v558
        %v560 = vpop.f32.mrf.mxu0
        %561 = vdwg.mxu0
        %v562 = vmax.f32 %v556, 0.0
        %v563 = vmax.f32 %v559, 0.0
        %v564 = vpack.c.bf16 %v563, %v562
        %565 = vmatprep.subr.bf16.mxu0 0
        %566 = vmatpush1.bf16.msra.mxu0 0
        %567 = vmatprep.subr.bf16.mxu0 0
        %568 = vmatpush1.bf16.msra.mxu0 0
        %569 = vmatprep.subr.bf16.mxu0 0
        %570 = vmatpush1.bf16.msra.mxu0 0
        %571 = vmatprep.subr.bf16.mxu0 0
        %572 = vmatpush1.bf16.msra.mxu0 0
        %573 = vmatprep.subr.bf16.mxu0 0
        %574 = vmatpush1.bf16.msra.mxu0 0
        %575 = vmatprep.subr.bf16.mxu0 0
        %576 = vmatpush1.bf16.msra.mxu0 0
        %577 = vmatprep.subr.bf16.mxu0 0
        %578 = vmatpush1.bf16.msra.mxu0 0
        %579 = vmatprep.subr.bf16.mxu0 0
        %580 = vmatpush1.bf16.msra.mxu0 %v564
        %581 = vmatprep.subr.bf16.mxu0 0
        %582 = vmatpush2.bf16.msra.mxu0 0
        %583 = vmatprep.subr.bf16.mxu0 0
        %584 = vmatpush2.bf16.msra.mxu0 0
        %585 = vmatprep.subr.bf16.mxu0 0
        %586 = vmatpush2.bf16.msra.mxu0 0
        %587 = vmatprep.subr.bf16.mxu0 0
        %588 = vmatpush2.bf16.msra.mxu0 0
        %589 = vmatprep.subr.bf16.mxu0 0
        %590 = vmatpush2.bf16.msra.mxu0 0
        %591 = vmatprep.subr.bf16.mxu0 0
        %592 = vmatpush2.bf16.msra.mxu0 0
        %593 = vmatprep.subr.bf16.mxu0 0
        %594 = vmatpush2.bf16.msra.mxu0 0
        %595 = vmatprep.subr.bf16.mxu0 0
        %596 = vmatpush2.bf16.msra.mxu0 0
        %597 = vmatprep.mubr.bf16.mxu0 0
        %598 = vmatmul.mubr.bf16.gmra.mxu0 %v344
        %v599 = vpop.f32.mrf.mxu0
        %v600 = vadd.f32 0.0, %v599
        %v601 = vpop.f32.mrf.mxu0
        %v602 = vpop.f32.mrf.mxu0
        %v603 = vadd.f32 0.0, %v602
        %v604 = vpop.f32.mrf.mxu0
        %605 = vdwg.mxu0
        %s606 = scalar_lea.vmem [#allocation10], 4
        %v607 = vld [vmem:[%s606] sm:$0xf]
        %v608 = vpack.c.bf16 %v603, %v600
        %s609 = scalar_lea.vmem [#allocation7], 16
        %v610 = vld [vmem:[%s609] sm:$0xf]
        %v611 = vld [vmem:[%s609 + $0x4] sm:$0xf]
        %v612 = vld [vmem:[%s609 + $0x8] sm:$0xf]
        %v613 = vld [vmem:[%s609 + $0xc] sm:$0xf]
        %v614 = vlaneseq
        %v615 = vshrl.u32 %v614, 7
        %v616 = vsub.s32 0, %v615
        %v617 = vrot.slane %v607, %v616
        %v622 = vunpack.c.l.b16 %v610
        %v623 = vunpack.c.l.b16 %v611
        %v624 = vunpack.c.l.b16 %v612
        %v625 = vunpack.c.l.b16 %v613
        %v626 = vpack.c.b16 %v623, %v622
        %v627 = vpack.c.b16 %v625, %v624
        %v631 = vsel %vm409, %v608, 0
        %633 = vmatprep.subr.bf16.mxu0 0
        %634 = vmatpush1.bf16.msra.mxu0 0
        %635 = vmatprep.subr.bf16.mxu0 0
        %636 = vmatpush1.bf16.msra.mxu0 0
        %637 = vmatprep.subr.bf16.mxu0 0
        %638 = vmatpush1.bf16.msra.mxu0 0
        %639 = vmatprep.subr.bf16.mxu0 0
        %640 = vmatpush1.bf16.msra.mxu0 0
        %641 = vmatprep.subr.bf16.mxu0 0
        %642 = vmatpush1.bf16.msra.mxu0 0
        %643 = vmatprep.subr.bf16.mxu0 0
        %644 = vmatpush1.bf16.msra.mxu0 0
        %645 = vmatprep.subr.bf16.mxu0 0
        %646 = vmatpush1.bf16.msra.mxu0 %v627
        %647 = vmatprep.subr.bf16.mxu0 0
        %648 = vmatpush1.bf16.msra.mxu0 %v626
        %649 = vmatprep.subr.bf16.mxu0 0
        %650 = vmatpush2.bf16.msra.mxu0 0
        %651 = vmatprep.subr.bf16.mxu0 0
        %652 = vmatpush2.bf16.msra.mxu0 0
        %653 = vmatprep.subr.bf16.mxu0 0
        %654 = vmatpush2.bf16.msra.mxu0 0
        %655 = vmatprep.subr.bf16.mxu0 0
        %656 = vmatpush2.bf16.msra.mxu0 0
        %657 = vmatprep.subr.bf16.mxu0 0
        %658 = vmatpush2.bf16.msra.mxu0 0
        %659 = vmatprep.subr.bf16.mxu0 0
        %660 = vmatpush2.bf16.msra.mxu0 0
        %661 = vmatprep.subr.bf16.mxu0 0
        %662 = vmatpush2.bf16.msra.mxu0 0
        %663 = vmatprep.subr.bf16.mxu0 0
        %664 = vmatpush2.bf16.msra.mxu0 0
        %665 = vmatprep.mubr.bf16.mxu0 0
        %666 = vmatmul.mubr.bf16.gmra.mxu0 %v631
        %v667 = vpop.f32.mrf.mxu0
        %v668 = vadd.f32 %v617, %v667
        %v669 = vpop.f32.mrf.mxu0
        %v670 = vpop.f32.mrf.mxu0
        %v671 = vadd.f32 %v617, %v670
        %v672 = vpop.f32.mrf.mxu0
        %673 = vdwg.mxu0
        %v674 = vadd.f32 %v668, %v671
        %v675 = vrot.slane %v674, 4
        %v676 = vadd.f32 %v674, %v675
        %v677 = vrot.slane %v676, 2
        %v678 = vadd.f32 %v676, %v677
        %v679 = vrot.slane %v678, 1
        %v680 = vadd.f32 %v678, %v679
        %v681 = vmul.f32 %v680, %v461
        %v682 = vsub.f32 %v668, %v681
        %v683 = vsub.f32 %v671, %v681
        %v684 = vmul.f32 %v682, %v682
        %v685 = vmul.f32 %v683, %v683
        %v686 = vadd.f32 %v684, %v685
        %v687 = vrot.slane %v686, 4
        %v688 = vadd.f32 %v686, %v687
        %v689 = vrot.slane %v688, 2
        %v690 = vadd.f32 %v688, %v689
        %v691 = vrot.slane %v690, 1
        %v692 = vadd.f32 %v690, %v691
        %v693 = vmul.f32 %v692, %v461
        %v694 = vadd.f32 %v693, 1e-05
        %v695 = vrsqrt.pop %v694
        %v696 = vmul.f32 %v607, %v695
        %v697 = vmul.f32 %v681, %v696
        %v699 = vrot.slane %v697, 7
        %v701 = vsub.f32 %v607, %v699
        %v702 = vlaneseq
        %v703 = vshrl.u32 %v702, 7
        %v704 = vsub.s32 1, %v703
        %v705 = vrot.slane %v696, %v704
        %v706 = vmul.f32 %v668, %v705
        %v707 = vmul.f32 %v671, %v705
        %v708 = vlaneseq
        %v709 = vshrl.u32 %v708, 7
        %v710 = vsub.s32 2, %v709
        %v711 = vrot.slane %v701, %v710
        %v712 = vadd.f32 %v706, %v711
        %v713 = vadd.f32 %v707, %v711
        %v714 = vmax.f32 %v712, 0.0
        %v715 = vmax.f32 %v713, 0.0
        %v716 = vpack.c.bf16 %v715, %v714
        %s717 = scalar_lea.vmem [#allocation8], 16
        %v718 = vld [vmem:[%s717] sm:$0xf]
        %v719 = vld [vmem:[%s717 + $0x4] sm:$0xf]
        %v720 = vld [vmem:[%s717 + $0x8] sm:$0xf]
        %v721 = vld [vmem:[%s717 + $0xc] sm:$0xf]
        %v722 = vlaneseq
        %v723 = vshrl.u32 %v722, 7
        %v724 = vsub.s32 3, %v723
        %v725 = vrot.slane %v607, %v724
        %v730 = vunpack.c.l.b16 %v718
        %v731 = vunpack.c.l.b16 %v719
        %v732 = vunpack.c.l.b16 %v720
        %v733 = vunpack.c.l.b16 %v721
        %v734 = vpack.c.b16 %v731, %v730
        %v735 = vpack.c.b16 %v733, %v732
        %v739 = vsel %vm409, %v716, 0
        %741 = vmatprep.subr.bf16.mxu0 0
        %742 = vmatpush1.bf16.msra.mxu0 0
        %743 = vmatprep.subr.bf16.mxu0 0
        %744 = vmatpush1.bf16.msra.mxu0 0
        %745 = vmatprep.subr.bf16.mxu0 0
        %746 = vmatpush1.bf16.msra.mxu0 0
        %747 = vmatprep.subr.bf16.mxu0 0
        %748 = vmatpush1.bf16.msra.mxu0 0
        %749 = vmatprep.subr.bf16.mxu0 0
        %750 = vmatpush1.bf16.msra.mxu0 0
        %751 = vmatprep.subr.bf16.mxu0 0
        %752 = vmatpush1.bf16.msra.mxu0 0
        %753 = vmatprep.subr.bf16.mxu0 0
        %754 = vmatpush1.bf16.msra.mxu0 %v735
        %755 = vmatprep.subr.bf16.mxu0 0
        %756 = vmatpush1.bf16.msra.mxu0 %v734
        %757 = vmatprep.subr.bf16.mxu0 0
        %758 = vmatpush2.bf16.msra.mxu0 0
        %759 = vmatprep.subr.bf16.mxu0 0
        %760 = vmatpush2.bf16.msra.mxu0 0
        %761 = vmatprep.subr.bf16.mxu0 0
        %762 = vmatpush2.bf16.msra.mxu0 0
        %763 = vmatprep.subr.bf16.mxu0 0
        %764 = vmatpush2.bf16.msra.mxu0 0
        %765 = vmatprep.subr.bf16.mxu0 0
        %766 = vmatpush2.bf16.msra.mxu0 0
        %767 = vmatprep.subr.bf16.mxu0 0
        %768 = vmatpush2.bf16.msra.mxu0 0
        %769 = vmatprep.subr.bf16.mxu0 0
        %770 = vmatpush2.bf16.msra.mxu0 0
        %771 = vmatprep.subr.bf16.mxu0 0
        %772 = vmatpush2.bf16.msra.mxu0 0
        %773 = vmatprep.mubr.bf16.mxu0 0
        %774 = vmatmul.mubr.bf16.gmra.mxu0 %v739
        %v775 = vpop.f32.mrf.mxu0
        %v776 = vadd.f32 %v725, %v775
        %v777 = vpop.f32.mrf.mxu0
        %v778 = vpop.f32.mrf.mxu0
        %v779 = vadd.f32 %v725, %v778
        %v780 = vpop.f32.mrf.mxu0
        %781 = vdwg.mxu0
        %782 = vst [vmem:[%s325] sm:$0xff] %v776
        %783 = vst [vmem:[%s325 + $0x8] sm:$0xff] %v779
        %s784 = sand.u32 %s149, 1
        %s785 = scalar_lea.sflag [#allocation4], %s784
        %s786 = sand.u32 %s149, 1
        %s787 = smul.addr %s786, 16
        %s788 = scalar_lea.vmem [#allocation11], %s787
        // Predicated region
        $region61: #{tpu_custom_call.1} parent=39 // pred_check
          %p789 = pneg %p159
        $region62: #{tpu_custom_call.1} parent=39 // pred_check_branch
          %791 = sbr.rel (%p789) target = $region64
        $region63: #{tpu_custom_call.1} parent=39 // pred_region
          %s793 = ssub.s32 256, 256
          %794 = vsyncadd %s785, %s793
          %s795 = smul.addr %s26, 2
          %s796 = smul.addr %s795, 128
          %s797 = scalar_lea.hbm %s5, %s796
          %s798 = sshll.u32 %s788, 4
          %s799 = int_to_ptr.vmem [resolvable:$true] %s798
          %804 = dma.vmem_to_hbm [thread:$0]  %s799, 256, %s797, %s785, 128, 128, 8
        $region64: #{tpu_custom_call.1} parent=39 // pred_fallthru
          _
      $region40: #{tpu_custom_call.1} parent=5 // pred_fallthru
        _
      %p805 = scmp.le.s32.totalorder 2, %s21
      // Predicated region
      $region65: #{tpu_custom_call.1} parent=5 // pred_check
        %p806 = pneg %p805
      $region66: #{tpu_custom_call.1} parent=5 // pred_check_branch
        %808 = sbr.rel (%p806) target = $region68
      $region67: #{tpu_custom_call.1} parent=5 // pred_region
        %s809 = ssub.s32 %s21, 2
        // Predicated region
        $region69: #{tpu_custom_call.1} parent=67 // pred_check
          %p810 = pneg %p165
        $region70: #{tpu_custom_call.1} parent=67 // pred_check_branch
          %812 = sbr.rel (%p810) target = $region72
        $region71: #{tpu_custom_call.1} parent=67 // pred_region
          %s813 = sand.u32 %s150, 1
          %s814 = scalar_lea.sflag [#allocation4], %s813
          %s815 = sand.u32 %s150, 1
          %s816 = smul.addr %s815, 16
          %s817 = scalar_lea.vmem [#allocation11], %s816
          %818 = dma.done %s814, 256
        $region72: #{tpu_custom_call.1} parent=67 // pred_fallthru
          _
      $region68: #{tpu_custom_call.1} parent=5 // pred_fallthru
        _
    $region6: #{tpu_custom_call.1} parent=1 // loop_footer
      %s25 = sadd.s32 1, %s21
    $region7: #{tpu_custom_call.1} parent=1 // loop_footer_branch
      %20 = sbr.rel target = $region3
    $region8: #{tpu_custom_call.1} parent=1 // loop_exit
      _
    %819 = vsyncpa [#allocation3], 1
    %s820 = scalar_lea.sflag [#allocation3], 1
    %821 = vsyncpa %s820, 1
    %822 = vsyncpa [#allocation6], 1
    %s823 = scalar_lea.sflag [#allocation6], 1
    %824 = vsyncpa %s823, 1
    %825 = vsyncpa [#allocation9], 1
    %826 = vsyncpa [#allocation4], 1
    %s827 = scalar_lea.sflag [#allocation4], 1
    %828 = vsyncpa %s827, 1

</llo_original>
